<compile_context>
chip_gen: v7x
topology: tpu7x:2x2x1
jax: 0.10.0
libtpu: 0.0.40
codegen_flags: <defaults>
</compile_context>

<pallas_src>
import functools
import math

import jax
import jax.numpy as jnp
from jax import lax
from jax.experimental import pallas as pl
from jax.experimental.pallas import tpu as pltpu

_VMEM_LIMIT_CACHE = None


def _vmem_limit_bytes():
    """48 MiB everywhere (safe under v7x's 64 MiB physical VMEM); 96 MiB on parts
    that clearly have 128 MiB VMEM (v5e / v6e)."""
    global _VMEM_LIMIT_CACHE
    if _VMEM_LIMIT_CACHE is None:
        limit = 48 * 1024 * 1024
        try:
            cap = int(pltpu.get_tpu_info().vmem_capacity_bytes)
            if cap >= (120 << 20):
                limit = 96 * 1024 * 1024
        except Exception:
            pass
        _VMEM_LIMIT_CACHE = limit
    return _VMEM_LIMIT_CACHE


def _pick_tile(dim, target, align):
    """Largest t <= target with dim % t == 0 and t % align == 0; else full dim.
    (Fallback to full dim only triggers for awkward sizes; fine at these shapes.)"""
    if dim <= target:
        return dim
    t = (target // align) * align
    while t >= align:
        if dim % t == 0:
            return t
        t -= align
    return dim


# ---------------------------------------------------------------------------
# Tiled linear (bf16 MXU operands, f32 accumulation)
# ---------------------------------------------------------------------------

def _matmul_kernel(x_ref, w_ref, b_ref, o_ref, acc_ref):
    @pl.when(pl.program_id(2) == 0)
    def _init():
        acc_ref[...] = jnp.zeros_like(acc_ref)

    acc_ref[...] += jnp.dot(x_ref[...], w_ref[...],
                            preferred_element_type=jnp.float32)

    @pl.when(pl.program_id(2) == pl.num_programs(2) - 1)
    def _finalize():
        o_ref[...] = (acc_ref[...] + b_ref[...]).astype(o_ref.dtype)


def pallas_linear(x, w, b, *, out_dtype=jnp.float32):
    """y = x @ w + b.  x: (M, K); w: (K, N) bf16 (pre-transposed at param-prep
    time); b: (N,) f32.  Activations cast to bf16 once here (no per-step cast)."""
    x = x.astype(jnp.bfloat16)
    M, K = x.shape
    N = w.shape[1]
    vlim = _vmem_limit_bytes()
    tm = _pick_tile(M, 1024 if vlim >= (80 << 20) else 512, 8)
    tk = _pick_tile(K, 1024, 128)
    tn = _pick_tile(N, 1024, 128)
    b2 = b.reshape(1, N)
    return pl.pallas_call(
        _matmul_kernel,
        out_shape=jax.ShapeDtypeStruct((M, N), out_dtype),
        grid=(M // tm, N // tn, K // tk),
        in_specs=[
            pl.BlockSpec((tm, tk), lambda i, j, kk: (i, kk)),
            pl.BlockSpec((tk, tn), lambda i, j, kk: (kk, j)),
            pl.BlockSpec((1, tn), lambda i, j, kk: (0, j)),
        ],
        out_specs=pl.BlockSpec((tm, tn), lambda i, j, kk: (i, j)),
        scratch_shapes=[pltpu.VMEM((tm, tn), jnp.float32)],
        compiler_params=pltpu.CompilerParams(
            dimension_semantics=("parallel", "parallel", "arbitrary"),
            vmem_limit_bytes=vlim),
    )(x, w, b2)


# ---------------------------------------------------------------------------
# Top-k windowed attention, query-axis tiled, head-blocked lane-dense output
# ---------------------------------------------------------------------------

def _attn_kernel(q_ref, k_ref, v_ref, m_ref, o_ref, *,
                 n_heads, d_k, q_off, k_off, v_off, window_size):
    # q_ref: (tq, Cq) bf16  |  k_ref, v_ref: (S, Ck) bf16
    # m_ref: (1, 1, S) int32 key-visibility  |  o_ref: (1, tq, n_heads*d_k) bf16
    S = k_ref.shape[0]
    W = min(window_size, S)
    kmask = m_ref[0] > 0                                     # (1, S) bool

    for hh in range(n_heads):                                # static, small
        q = q_ref[:, q_off + hh * d_k: q_off + (hh + 1) * d_k]   # (tq, d_k)
        k = k_ref[:, k_off + hh * d_k: k_off + (hh + 1) * d_k]   # (S,  d_k)
        v = v_ref[:, v_off + hh * d_k: v_off + (hh + 1) * d_k]   # (S,  d_k)

        # scores = q @ k^T  ('qd,kd->qk'); 1/sqrt(d_k) pre-folded into Q weights.
        scores = lax.dot_general(q, k, (((1,), (1,)), ((), ())),
                                 preferred_element_type=jnp.float32)  # (tq,S) f32

        # Exact per-row W-th-largest threshold in fixed cost: 32-step binary
        # search over an order-preserving int32 remap of the f32 bits.
        # Top-k runs on the RAW scores (masked keys included), matching the
        # PyTorch order of topk before masked_fill.
        # TODO(synk): exact torch.topk tie-breaking (keep exactly k on ties) is
        #             not reproduced; ties at the threshold are all kept.
        sbits = pltpu.bitcast(scores, jnp.int32)
        codes = jnp.where(sbits >= 0, sbits, sbits ^ jnp.int32(0x7FFFFFFF))
        lo0 = jnp.full((scores.shape[0], 1), jnp.iinfo(jnp.int32).min, jnp.int32)
        hi0 = jnp.full((scores.shape[0], 1), jnp.iinfo(jnp.int32).max, jnp.int32)

        def bisect(_, carry):
            lo, hi = carry
            mid = lo + lax.shift_right_logical(hi - lo, jnp.int32(1))
            cnt = jnp.sum((codes > mid).astype(jnp.int32),
                          axis=-1, keepdims=True)
            go_up = cnt >= W
            return jnp.where(go_up, mid + 1, lo), jnp.where(go_up, hi, mid)

        thr, _ = lax.fori_loop(0, 32, bisect, (lo0, hi0))    # (tq,1) kth-largest

        keep = jnp.logical_and(codes >= thr, kmask)          # (tq, S)
        masked = jnp.where(keep, scores, jnp.float32(-1e9))

        # softmax over keys in f32; denominator reciprocal on the EUP slot.
        # TODO(synk): bf16 exp input on v6e/v7x would double EUP throughput; kept
        #             f32 for v5e compatibility and tighter numerics.
        row_max = jnp.max(masked, axis=-1, keepdims=True)
        e = jnp.exp(masked - row_max)
        p = e * pl.reciprocal(jnp.sum(e, axis=-1, keepdims=True), approx=True)
        # TODO(synk): nn.Dropout(p=0.1) on p_attn is identity in eval mode; omitted.

        out = jnp.dot(p.astype(jnp.bfloat16), v, preferred_element_type=jnp.float32)
        o_ref[0, :, hh * d_k:(hh + 1) * d_k] = out.astype(o_ref.dtype)


def _attn_q_tile(S, vmem_limit, kv_width):
    """VMEM-aware q tile: K/V blocks (bf16, double-buffered) + ~6 live (tq,S)
    4-byte slabs must fit under the scoped limit."""
    kv_bytes = 2 * 2 * 2 * S * kv_width
    budget = max(4 << 20, vmem_limit - kv_bytes - (8 << 20))
    cap = max(8, (budget // (6 * 4 * S) // 8) * 8)
    return _pick_tile(S, min(512, cap), 8)


def pallas_topk_attention(qkv, mask, *, B, S, h, d_k, window_size):
    """qkv: (B*S, 3*d_model) bf16 fused Q|K|V projections (Q pre-scaled);
    mask: (B, 1, S) int32.  Returns (B, S, d_model) bf16, written lane-dense
    directly in (B, S, d_model) layout (no post-attention transpose)."""
    d_model = h * d_k

    # Head-block so the attention output block's last dim is >= 128 lanes when
    # the model allows it; otherwise fall back to one full-width column block.
    if d_k % 128 == 0:
        hb, full_cols = 1, False
    elif (128 % d_k == 0) and (d_model % 128 == 0):
        hb, full_cols = 128 // d_k, False
    else:
        hb, full_cols = h, True
    n_hblk = h // hb

    vlim = _vmem_limit_bytes()
    kv_width = 3 * d_model if full_cols else hb * d_k
    tq = _attn_q_tile(S, vlim, kv_width)
    n_qt = S // tq

    if full_cols:
        C = 3 * d_model
        q_spec = pl.BlockSpec((tq, C), lambda b, hh, qi: (b * n_qt + qi, 0))
        k_spec = pl.BlockSpec((S, C), lambda b, hh, qi: (b, 0))
        v_spec = pl.BlockSpec((S, C), lambda b, hh, qi: (b, 0))
        q_off, k_off, v_off = 0, d_model, 2 * d_model
        out_spec = pl.BlockSpec((1, tq, d_model), lambda b, hh, qi: (b, qi, 0))
    else:
        hbd = hb * d_k
        q_spec = pl.BlockSpec((tq, hbd), lambda b, hh, qi: (b * n_qt + qi, hh))
        k_spec = pl.BlockSpec((S, hbd), lambda b, hh, qi: (b, n_hblk + hh))
        v_spec = pl.BlockSpec((S, hbd), lambda b, hh, qi: (b, 2 * n_hblk + hh))
        q_off = k_off = v_off = 0
        out_spec = pl.BlockSpec((1, tq, hbd), lambda b, hh, qi: (b, qi, hh))

    kern = functools.partial(_attn_kernel, n_heads=hb, d_k=d_k,
                             q_off=q_off, k_off=k_off, v_off=v_off,
                             window_size=window_size)
    return pl.pallas_call(
        kern,
        out_shape=jax.ShapeDtypeStruct((B, S, d_model), jnp.bfloat16),
        grid=(B, n_hblk, n_qt),
        in_specs=[q_spec, k_spec, v_spec,
                  pl.BlockSpec((1, 1, S), lambda b, hh, qi: (b, 0, 0))],
        out_specs=out_spec,
        compiler_params=pltpu.CompilerParams(
            dimension_semantics=("parallel", "parallel", "parallel"),
            vmem_limit_bytes=vlim),
    )(qkv, qkv, qkv, mask)


# ---------------------------------------------------------------------------
# Module wrapper (parameter prep done once; no per-call weight transposes)
# ---------------------------------------------------------------------------

def init_params(key, d_model):
    """Deterministic nn.Linear-style init for the 4 layers (PyTorch (out, in))."""
    bound = 1.0 / math.sqrt(d_model)
    params = []
    for _ in range(4):
        key, k1, k2 = jax.random.split(key, 3)
        w = jax.random.uniform(k1, (d_model, d_model), jnp.float32, -bound, bound)
        b = jax.random.uniform(k2, (d_model,), jnp.float32, -bound, bound)
        params.append((w, b))
    return params


def prepare_params(params, h):
    """One-time prep: transpose to (in, out), fuse Q/K/V weights, fold 1/sqrt(d_k)
    into the Q slice, cast weights to bf16."""
    (wq, bq), (wk, bk), (wv, bv), (wo, bo) = params
    d_model = wq.shape[0]
    d_k = d_model // h
    scale = jnp.float32(1.0 / math.sqrt(d_k))
    w_qkv = jnp.concatenate([wq.T * scale, wk.T, wv.T], axis=1).astype(jnp.bfloat16)
    b_qkv = jnp.concatenate([bq * scale, bk, bv]).astype(jnp.float32)
    w_out = wo.T.astype(jnp.bfloat16)
    b_out = bo.astype(jnp.float32)
    return w_qkv, b_qkv, w_out, b_out


def multi_headed_attention(prepared, query, key, value, mask, *, h, window_size):
    """Forward pass of MultiHeadedAttention. query/key/value: (B, S, d_model)."""
    B, S, d_model = query.shape
    assert d_model % h == 0
    d_k = d_model // h
    window_size = min(window_size, S)
    w_qkv, b_qkv, w_out, b_out = prepared

    if mask is None:
        mask = jnp.ones((B, 1, S), jnp.int32)
    mask = mask.astype(jnp.int32)

    if query is key and key is value:        # self-attention: one fused QKV matmul
        qkv = pallas_linear(query.reshape(B * S, d_model).astype(jnp.bfloat16),
                            w_qkv, b_qkv, out_dtype=jnp.bfloat16)  # (B*S, 3*d_model)
    else:                                    # distinct q/k/v sources (cross-attn)
        def proj(x, lo, hi):
            return pallas_linear(x.reshape(B * S, d_model).astype(jnp.bfloat16),
                                 w_qkv[:, lo:hi], b_qkv[lo:hi],
                                 out_dtype=jnp.bfloat16)
        qkv = jnp.concatenate([proj(query, 0, d_model),
                               proj(key, d_model, 2 * d_model),
                               proj(value, 2 * d_model, 3 * d_model)], axis=-1)

    # Attention consumes the fused QKV matrix directly and writes (B, S, d_model)
    # lane-dense -> no head reshape/transpose round trips around the kernel.
    x = pallas_topk_attention(qkv, mask, B=B, S=S, h=h, d_k=d_k,
                              window_size=window_size)            # (B, S, d_model)
    out = pallas_linear(x.reshape(B * S, d_model), w_out, b_out,
                        out_dtype=jnp.float32)
    return out.reshape(B, S, d_model)


# ---------------------------------------------------------------------------
# Pure-JAX references mirroring the kernel numerics (bf16 MXU operands, f32 acc)
# ---------------------------------------------------------------------------

def reference_qkv(x_flat_bf16, w_qkv, b_qkv):
    y = jnp.dot(x_flat_bf16, w_qkv, preferred_element_type=jnp.float32) + b_qkv
    return y.astype(jnp.bfloat16)


def reference_attention_tail(qkv, prepared, mask, *, B, S, h, window_size):
    """Reference for the attention + output-projection stages, consuming the
    fused QKV projection output (Q already 1/sqrt(d_k)-scaled), so the top-k
    selection is compared on identical scores; eval-mode semantics."""
    d_model = qkv.shape[-1] // 3
    d_k = d_model // h
    window_size = min(window_size, S)
    _, _, w_out, b_out = prepared

    def to_heads(y):
        return y.reshape(B, S, h, d_k).transpose(0, 2, 1, 3)

    q = to_heads(qkv[:, :d_model])
    k = to_heads(qkv[:, d_model:2 * d_model])
    v = to_heads(qkv[:, 2 * d_model:])

    scores = jnp.einsum("bhqd,bhkd->bhqk", q, k,
                        preferred_element_type=jnp.float32)
    thr = lax.top_k(scores, window_size)[0][..., -1:]
    keep = jnp.logical_and(scores >= thr, mask[:, None] > 0)
    scores = jnp.where(keep, scores, jnp.float32(-1e9))
    p = jax.nn.softmax(scores, axis=-1)
    x = jnp.einsum("bhqk,bhkd->bhqd", p.astype(jnp.bfloat16), v,
                   preferred_element_type=jnp.float32).astype(jnp.bfloat16)
    x = x.transpose(0, 2, 1, 3).reshape(B * S, d_model)
    out = jnp.dot(x, w_out, preferred_element_type=jnp.float32) + b_out
    return out.reshape(B, S, d_model)


def _run_case(x_in, mask, params_key, *, h, window):
    B, S, d_model = x_in.shape
    params = init_params(params_key, d_model)
    prepared = prepare_params(params, h)
    w_qkv, b_qkv, _, _ = prepared

    x16 = x_in.reshape(B * S, d_model).astype(jnp.bfloat16)
    qkv_k = jax.block_until_ready(
        pallas_linear(x16, w_qkv, b_qkv, out_dtype=jnp.bfloat16))
    qkv_r = reference_qkv(x16, w_qkv, b_qkv)
    err_qkv = float(jnp.max(jnp.abs(qkv_k.astype(jnp.float32)
                                    - qkv_r.astype(jnp.float32))))
    assert jnp.allclose(qkv_k.astype(jnp.float32), qkv_r.astype(jnp.float32),
                        atol=3e-2, rtol=3e-2), err_qkv

    out = jax.block_until_ready(
        multi_headed_attention(prepared, x_in, x_in, x_in, mask,
                               h=h, window_size=window))
    ref = reference_attention_tail(qkv_k, prepared, mask,
                                   B=B, S=S, h=h, window_size=window)
    err = float(jnp.max(jnp.abs(out - ref)))
    assert jnp.allclose(out, ref, atol=2e-2, rtol=2e-2), err


if __name__ == "__main__":
    root = jax.random.PRNGKey(0)

    # Case 1: tiny config (d_k < 128 -> full-column fallback path)
    B, S, d_model, h, window = 2, 8, 32, 4, 4
    root, kx = jax.random.split(root)
    x_in = jax.random.normal(kx, (B, S, d_model), jnp.float32)
    mask = jnp.ones((B, 1, S), jnp.int32).at[:, :, -2:].set(0)
    _run_case(x_in, mask, jax.random.PRNGKey(42), h=h, window=window)

    # Case 2: d_k = 64 -> head-blocked lane-dense (hb*d_k = 128) path
    B2, S2, d_model2, h2, window2 = 1, 16, 256, 4, 5
    root, kx2 = jax.random.split(root)
    x_in2 = jax.random.normal(kx2, (B2, S2, d_model2), jnp.float32)
    mask2 = jnp.ones((B2, 1, S2), jnp.int32).at[:, :, -3:].set(0)
    _run_case(x_in2, mask2, jax.random.PRNGKey(7), h=h2, window=window2)

    print("KERNEL_OK")
</pallas_src>

<mosaic_0001>
module attributes {stable_mosaic.version = 11 : i64} {
  func.func @_matmul_kernel(%arg0: i32, %arg1: i32, %arg2: i32, %arg3: memref<16x32xbf16, #tpu.memory_space<vmem>>, %arg4: memref<32x96xbf16, #tpu.memory_space<vmem>>, %arg5: memref<1x96xf32, #tpu.memory_space<vmem>>, %arg6: memref<16x96xbf16, #tpu.memory_space<vmem>>, %arg7: memref<16x96xf32, #tpu.memory_space<vmem>>) attributes {dimension_semantics = [#tpu.dimension_semantics<parallel>, #tpu.dimension_semantics<parallel>, #tpu.dimension_semantics<arbitrary>], iteration_bounds = array<i64: 1, 1, 1>, scalar_prefetch = 0 : i64, scratch_operands = 1 : i64, tpu.core_type = #tpu.core_type<tc>, window_params = [{transform_indices = @transform_0, window_bounds = array<i64: 16, 32>}, {transform_indices = @transform_1, window_bounds = array<i64: 32, 96>}, {transform_indices = @transform_2, window_bounds = array<i64: 1, 96>}, {transform_indices = @transform_3, window_bounds = array<i64: 16, 96>}]} {
    %c0_i32 = arith.constant 0 : i32
    %0 = arith.cmpi eq, %arg2, %c0_i32 : i32
    %1 = arith.extui %0 : i1 to i32
    %c0_i32_0 = arith.constant 0 : i32
    %2 = arith.cmpi ne, %1, %c0_i32_0 : i32
    scf.if %2 {
      %cst_10 = arith.constant 0.000000e+00 : f32
      %12 = vector.broadcast %cst_10 : f32 to vector<16x96xf32>
      %c0_11 = arith.constant 0 : index
      %c0_12 = arith.constant 0 : index
      %13 = vector.load %arg7[%c0_11, %c0_12] : memref<16x96xf32, #tpu.memory_space<vmem>>, vector<16x96xf32>
      tpu.vector_store %arg7[%c0_11, %c0_12], %12 {strides = array<i32>} : memref<16x96xf32, #tpu.memory_space<vmem>>, vector<16x96xf32>,
    } else {
    }
    %c0 = arith.constant 0 : index
    %c0_1 = arith.constant 0 : index
    %3 = vector.load %arg7[%c0, %c0_1] : memref<16x96xf32, #tpu.memory_space<vmem>>, vector<16x96xf32>
    %c0_2 = arith.constant 0 : index
    %c0_3 = arith.constant 0 : index
    %4 = vector.load %arg3[%c0_2, %c0_3] : memref<16x32xbf16, #tpu.memory_space<vmem>>, vector<16x32xbf16>
    %c0_4 = arith.constant 0 : index
    %c0_5 = arith.constant 0 : index
    %5 = vector.load %arg4[%c0_4, %c0_5] : memref<32x96xbf16, #tpu.memory_space<vmem>>, vector<32x96xbf16>
    %cst = arith.constant dense<0.000000e+00> : vector<16x96xf32>
    %6 = tpu.matmul %4, %5, %cst {dimension_numbers = #tpu.dot_dimension_numbers<[1], [0], [0], [1], [0, 0, 1, 1], [], []>} : vector<16x32xbf16>, vector<32x96xbf16>, vector<16x96xf32> -> vector<16x96xf32>
    %7 = arith.addf %3, %6 : vector<16x96xf32>
    %c0_6 = arith.constant 0 : index
    %c0_7 = arith.constant 0 : index
    %8 = vector.load %arg7[%c0_6, %c0_7] : memref<16x96xf32, #tpu.memory_space<vmem>>, vector<16x96xf32>
    tpu.vector_store %arg7[%c0_6, %c0_7], %7 {strides = array<i32>} : memref<16x96xf32, #tpu.memory_space<vmem>>, vector<16x96xf32>,
    %c0_i32_8 = arith.constant 0 : i32
    %9 = arith.cmpi eq, %arg2, %c0_i32_8 : i32
    %10 = arith.extui %9 : i1 to i32
    %c0_i32_9 = arith.constant 0 : i32
    %11 = arith.cmpi ne, %10, %c0_i32_9 : i32
    scf.if %11 {
      %c0_10 = arith.constant 0 : index
      %c0_11 = arith.constant 0 : index
      %12 = vector.load %arg7[%c0_10, %c0_11] : memref<16x96xf32, #tpu.memory_space<vmem>>, vector<16x96xf32>
      %c0_12 = arith.constant 0 : index
      %c0_13 = arith.constant 0 : index
      %13 = vector.load %arg5[%c0_12, %c0_13] : memref<1x96xf32, #tpu.memory_space<vmem>>, vector<1x96xf32>
      %14 = vector.broadcast %13 : vector<1x96xf32> to vector<16x96xf32>
      %15 = arith.addf %12, %14 : vector<16x96xf32>
      %16 = arith.truncf %15 : vector<16x96xf32> to vector<16x96xbf16>
      %c0_14 = arith.constant 0 : index
      %c0_15 = arith.constant 0 : index
      %17 = vector.load %arg6[%c0_14, %c0_15] : memref<16x96xbf16, #tpu.memory_space<vmem>>, vector<16x96xbf16>
      tpu.vector_store %arg6[%c0_14, %c0_15], %16 {strides = array<i32>} : memref<16x96xbf16, #tpu.memory_space<vmem>>, vector<16x96xbf16>,
    } else {
    }
    return
  }
  func.func @transform_0(%arg0: i32, %arg1: i32, %arg2: i32) -> (i32, i32) {
    %c0_i32 = arith.constant 0 : i32
    return %arg0, %arg2 : i32, i32
  }
  func.func @transform_1(%arg0: i32, %arg1: i32, %arg2: i32) -> (i32, i32) {
    %c0_i32 = arith.constant 0 : i32
    return %arg2, %arg1 : i32, i32
  }
  func.func @transform_2(%arg0: i32, %arg1: i32, %arg2: i32) -> (i32, i32) {
    %c0_i32 = arith.constant 0 : i32
    %c0_i32_0 = arith.constant 0 : i32
    return %c0_i32, %arg1 : i32, i32
  }
  func.func @transform_3(%arg0: i32, %arg1: i32, %arg2: i32) -> (i32, i32) {
    %c0_i32 = arith.constant 0 : i32
    return %arg0, %arg1 : i32, i32
  }
}

</mosaic_0001>

<llo_original>
// kernel: tpu_custom_call.1
$region0: #{tpu_custom_call.1}
  #allocation0 [shape = 'u32[]', space=smem, size = 0x4, offset = 0x4, fixed_abs, tag = 'smem constant byte address 0x4 - core index']
  #allocation1 [shape = 'u32[144,128]{1,0:T(1,128)}', space=vmem, size = 0x12000, scoped, tag = 'internal scratch']
  #allocation2 [shape = 'f32[16,96]{1,0:T(8,128)}', space=vmem, size = 0x2000, scoped, tag = 'scratch operand']
  %s0 = inlined_call_operand.hbm [shape: bf16[16,32], index: 0, kind: input, shape index: {}]
  %s1 = inlined_call_operand.hbm [shape: bf16[32,96], index: 1, kind: input, shape index: {}]
  %s2 = inlined_call_operand.vmem [shape: f32[1,96], index: 2, kind: input, shape index: {}]
  %s3 = inlined_call_operand.hbm [shape: bf16[16,96], index: 3, kind: output, shape index: {}]
  %s4 = sld [smem:[#allocation0]]
  $region38: #{tpu_custom_call.1} parent=0
    _
  %s6 = ssub.s32 1, %s4
  %s7 = scalar_select 0, %s6, %s4
  $region1: #{tpu_custom_call.1} parent=0
    #allocation3 [shape = 'u8[4096]{0}', space=vmem, size = 0x1000, scoped, tag = 'input window, operand 0, single buffered']
    #allocation4 [shape = 's32[1]{0}', space=sflag, size = 0x4, scoped, tag = 'scoped memory for tpu_custom_call.1']
    #allocation5 [shape = 's32[1]{0}', space=sflag, size = 0x4, scoped, tag = 'scoped memory for tpu_custom_call.1']
    #allocation6 [shape = 'u8[8192]{0}', space=vmem, size = 0x2000, scoped, tag = 'input window, operand 1, single buffered']
    #allocation7 [shape = 's32[1]{0}', space=sflag, size = 0x4, scoped, tag = 'scoped memory for tpu_custom_call.1']
    #allocation8 [shape = 'u8[4096]{0}', space=vmem, size = 0x1000, scoped, tag = 'output window, operand 0, single buffered']
    %8 = vsyncpa [#allocation4], 0
    %9 = vsyncpa [#allocation7], 0
    %10 = vsyncpa [#allocation5], 0
    // Predicated region
    $region2: #{tpu_custom_call.1} parent=1 // pred_check
      _
    $region3: #{tpu_custom_call.1} parent=1 // pred_check_branch
      %12 = sbr.rel (0) target = $region5
    $region4: #{tpu_custom_call.1} parent=1 // pred_region
      %s14 = ssub.s32 128, 128
      %15 = vsyncadd [#allocation4], %s14
      %s16 = sshll.u32 [#allocation3], 4
      %s17 = int_to_ptr.vmem [resolvable:$true] %s16
      %22 = dma.hbm_to_vmem [thread:$0]  %s0, 128, %s17, [#allocation4], 64, 64, 4
    $region5: #{tpu_custom_call.1} parent=1 // pred_fallthru
      _
    // Predicated region
    $region6: #{tpu_custom_call.1} parent=1 // pred_check
      _
    $region7: #{tpu_custom_call.1} parent=1 // pred_check_branch
      %24 = sbr.rel (0) target = $region9
    $region8: #{tpu_custom_call.1} parent=1 // pred_region
      %s26 = ssub.s32 256, 256
      %27 = vsyncadd [#allocation7], %s26
      %s28 = sshll.u32 [#allocation6], 4
      %s29 = int_to_ptr.vmem [resolvable:$true] %s28
      %34 = dma.hbm_to_vmem [thread:$0]  %s1, 256, %s29, [#allocation7], 64, 64, 4
    $region9: #{tpu_custom_call.1} parent=1 // pred_fallthru
      _
    // Predicated region
    $region10: #{tpu_custom_call.1} parent=1 // pred_check
      _
    $region11: #{tpu_custom_call.1} parent=1 // pred_check_branch
      %36 = sbr.rel (0) target = $region13
    $region12: #{tpu_custom_call.1} parent=1 // pred_region
      _
    $region13: #{tpu_custom_call.1} parent=1 // pred_fallthru
      _
    // Predicated region
    $region14: #{tpu_custom_call.1} parent=1 // pred_check
      _
    $region15: #{tpu_custom_call.1} parent=1 // pred_check_branch
      %38 = sbr.rel (0) target = $region17
    $region16: #{tpu_custom_call.1} parent=1 // pred_region
      %39 = dma.done [#allocation4], 128
    $region17: #{tpu_custom_call.1} parent=1 // pred_fallthru
      _
    // Predicated region
    $region18: #{tpu_custom_call.1} parent=1 // pred_check
      _
    $region19: #{tpu_custom_call.1} parent=1 // pred_check_branch
      %41 = sbr.rel (0) target = $region21
    $region20: #{tpu_custom_call.1} parent=1 // pred_region
      %42 = dma.done [#allocation7], 256
    $region21: #{tpu_custom_call.1} parent=1 // pred_fallthru
      _
    %p44 = scmp.eq.s32.totalorder 0, 0
    // Predicated region
    $region22: #{tpu_custom_call.1} parent=1 // pred_check
      %p45 = pneg %p44
    $region23: #{tpu_custom_call.1} parent=1 // pred_check_branch
      %47 = sbr.rel (%p45) target = $region25
    $region24: #{tpu_custom_call.1} parent=1 // pred_region
      %vm48 = vcmask 785408
      %49 = vst.msk [vmem:[#allocation2] sm:$0xff] %vm48, 0.0
      %50 = vst.msk [vmem:[#allocation2 + $0x8] sm:$0xff] %vm48, 0.0
    $region25: #{tpu_custom_call.1} parent=1 // pred_fallthru
      _
    %v51 = vld [vmem:[#allocation2] sm:$0xff]
    %v52 = vld [vmem:[#allocation2 + $0x8] sm:$0xff]
    %v53 = vld [vmem:[#allocation3] sm:$0xf]
    %v54 = vld [vmem:[#allocation3 + $0x4] sm:$0xf]
    %v55 = vld [vmem:[#allocation6] sm:$0xf]
    %v56 = vld [vmem:[#allocation6 + $0x4] sm:$0xf]
    %v57 = vld [vmem:[#allocation6 + $0x8] sm:$0xf]
    %v58 = vld [vmem:[#allocation6 + $0xc] sm:$0xf]
    %v61 = vunpack.c.l.b16 %v53
    %v62 = vunpack.c.l.b16 %v54
    %v63 = vpack.c.b16 %v62, %v61
    %v68 = vunpack.c.l.b16 %v55
    %v69 = vunpack.c.l.b16 %v56
    %v70 = vunpack.c.l.b16 %v57
    %v71 = vunpack.c.l.b16 %v58
    %v72 = vpack.c.b16 %v69, %v68
    %v73 = vpack.c.b16 %v71, %v70
    %vm76 = vcmask 261120
    %v78 = vsel %vm76, %v63, 0
    %80 = vmatprep.subr.bf16.mxu0 0
    %81 = vmatpush1.bf16.msra.mxu0 %v72
    %82 = vmatprep.subr.bf16.mxu0 0
    %83 = vmatpush1.bf16.msra.mxu0 %v73
    %84 = vmatprep.subr.bf16.mxu0 0
    %85 = vmatpush1.bf16.msra.mxu0 0
    %86 = vmatprep.subr.bf16.mxu0 0
    %87 = vmatpush1.bf16.msra.mxu0 0
    %88 = vmatprep.subr.bf16.mxu0 0
    %89 = vmatpush1.bf16.msra.mxu0 0
    %90 = vmatprep.subr.bf16.mxu0 0
    %91 = vmatpush1.bf16.msra.mxu0 0
    %92 = vmatprep.subr.bf16.mxu0 0
    %93 = vmatpush1.bf16.msra.mxu0 0
    %94 = vmatprep.subr.bf16.mxu0 0
    %95 = vmatpush1.bf16.msra.mxu0 0
    %96 = vmatprep.subr.bf16.mxu0 0
    %97 = vmatpush1.bf16.msra.mxu0 0
    %98 = vmatprep.subr.bf16.mxu0 0
    %99 = vmatpush1.bf16.msra.mxu0 0
    %100 = vmatprep.subr.bf16.mxu0 0
    %101 = vmatpush1.bf16.msra.mxu0 0
    %102 = vmatprep.subr.bf16.mxu0 0
    %103 = vmatpush1.bf16.msra.mxu0 0
    %104 = vmatprep.subr.bf16.mxu0 0
    %105 = vmatpush1.bf16.msra.mxu0 0
    %106 = vmatprep.subr.bf16.mxu0 0
    %107 = vmatpush1.bf16.msra.mxu0 0
    %108 = vmatprep.subr.bf16.mxu0 0
    %109 = vmatpush1.bf16.msra.mxu0 0
    %110 = vmatprep.subr.bf16.mxu0 0
    %111 = vmatpush1.bf16.msra.mxu0 0
    %112 = vmatprep.mubr.bf16.mxu0 0
    %113 = vmatmul.mubr.bf16.gmra.mrb[0].mxu0 %v78
    %v114 = vpop.f32.mrb[0].mxu0
    %v115 = vadd.f32 0.0, %v114
    %v116 = vpop.f32.mrb[0].mxu0
    %v117 = vpop.f32.mrb[0].mxu0
    %v118 = vadd.f32 0.0, %v117
    %v119 = vpop.f32.mrb[0].mxu0
    %120 = vdwg.mxu0
    %v121 = vadd.f32 %v51, %v115
    %v122 = vadd.f32 %v52, %v118
    %vm123 = vcmask 785408
    %124 = vst.msk [vmem:[#allocation2] sm:$0xff] %vm123, %v121
    %125 = vst.msk [vmem:[#allocation2 + $0x8] sm:$0xff] %vm123, %v122
    // Predicated region
    $region26: #{tpu_custom_call.1} parent=1 // pred_check
      %p126 = pneg %p44
    $region27: #{tpu_custom_call.1} parent=1 // pred_check_branch
      %128 = sbr.rel (%p126) target = $region29
    $region28: #{tpu_custom_call.1} parent=1 // pred_region
      %v129 = vld [vmem:[#allocation2] sm:$0xff]
      %v130 = vld [vmem:[#allocation2 + $0x8] sm:$0xff]
      %v131 = vld [vmem:[%s2] sm:$0x1]
      %v133 = vlaneseq
      %v134 = vshrl.u32 %v133, 7
      %v135 = vsub.s32 0, %v134
      %v136 = vrot.slane %v131, %v135
      %v138 = vadd.f32 %v129, %v136
      %v139 = vadd.f32 %v130, %v136
      %v140 = vpack.c.bf16 %v139, %v138
      %v142 = vunpack.c.l.b16 %v140
      %v143 = vunpack.c.h.b16 %v140
      %v144 = vpack.c.b16 %v142, %v142
      %v145 = vpack.c.b16 %v143, %v143
      %vm148 = vcmask 781312
      %149 = vst.msk [vmem:[#allocation8] sm:$0xf] %vm148, %v144
      %150 = vst.msk [vmem:[#allocation8 + $0x4] sm:$0xf] %vm148, %v145
    $region29: #{tpu_custom_call.1} parent=1 // pred_fallthru
      _
    // Predicated region
    $region30: #{tpu_custom_call.1} parent=1 // pred_check
      _
    $region31: #{tpu_custom_call.1} parent=1 // pred_check_branch
      %152 = sbr.rel (0) target = $region33
    $region32: #{tpu_custom_call.1} parent=1 // pred_region
      %s154 = ssub.s32 128, 128
      %155 = vsyncadd [#allocation5], %s154
      %s156 = sshll.u32 [#allocation8], 4
      %s157 = int_to_ptr.vmem [resolvable:$true] %s156
      %162 = dma.vmem_to_hbm [thread:$0]  %s157, 128, %s3, [#allocation5], 64, 64, 4
    $region33: #{tpu_custom_call.1} parent=1 // pred_fallthru
      _
    // Predicated region
    $region34: #{tpu_custom_call.1} parent=1 // pred_check
      _
    $region35: #{tpu_custom_call.1} parent=1 // pred_check_branch
      %164 = sbr.rel (0) target = $region37
    $region36: #{tpu_custom_call.1} parent=1 // pred_region
      %165 = dma.done [#allocation5], 128
    $region37: #{tpu_custom_call.1} parent=1 // pred_fallthru
      _
    %166 = vsyncpa [#allocation4], 1
    %167 = vsyncpa [#allocation7], 1
    %168 = vsyncpa [#allocation5], 1

</llo_original>
